<compile_context>
chip_gen: v7x
topology: tpu7x:2x2x1
jax: 0.10.0
libtpu: 0.0.40
codegen_flags: <defaults>
</compile_context>

<pallas_src>
import functools

import jax
import jax.numpy as jnp
from jax.experimental import pallas as pl
from jax.experimental.pallas import tpu as pltpu


def _round_up(v: int, m: int) -> int:
    return ((v + m - 1) // m) * m


def _cdiv(a: int, b: int) -> int:
    return -(-a // b)


def _tpu_generation() -> str:
    try:
        kind = jax.devices()[0].device_kind.lower()
    except Exception:
        return "unknown"
    if "v6" in kind:
        return "v6e"
    if "7" in kind:                      # TPU7x / v7x
        return "v7x"
    if "v5" in kind:
        return "v5e" if ("lite" in kind or "5e" in kind) else "v5p"
    return "unknown"


# (x-tile byte budget, vmem_limit_bytes) per generation.  v7x has 64 MiB
# physical VMEM (smaller budget / cap); v5e/v6e have 128 MiB.
_GEN_CFG = {
    "v5e":     (6 << 20, 100 << 20),
    "v5p":     (8 << 20, 100 << 20),
    "v6e":     (8 << 20, 100 << 20),
    "v7x":     (3 << 20, 48 << 20),
    "unknown": (2 << 20, None),
}


def _choose_tiles(B: int, C: int, HW: int, itemsize: int, budget: int):
    """Pick (tb, thw).  thw is a multiple of 128; tb shrinks for large C so the
    x tile respects the byte budget with >= 512-lane (>= 2 KiB) DMA rows."""
    if B >= 64:
        tb = 16
    elif B >= 16:
        tb = 8
    elif B >= 2:
        tb = _cdiv(B, 2)       # two blocks on the "parallel" axis -> v7x dual TC
    else:
        tb = 1                 # TODO(synk): B==1 could core-parallelize the HW reduction on v7x.
    tb = max(1, min(tb, budget // max(1, C * itemsize * 512)))
    hw_ceil = max(128, (HW // 128) * 128)
    cap = max(128, (budget // max(1, tb * C * itemsize)) // 128 * 128)
    thw = min(hw_ceil, cap)
    if HW % 128 == 0:
        while HW % thw != 0:   # prefer divisors of HW -> no tail masking at all
            thw -= 128
    return tb, thw


def _unmix_train_kernel(m_ref, mask_ref, x_ref, w1_ref, w2_ref, b1_ref, b2_ref,
                        out_ref, s_ref, *, inv_hw, rem, opad):
    """grid = (B tiles, HW tiles); HW is the trailing 'arbitrary' reduction.

    m_ref   : SMEM (1,) f32       fadeout weight m (runtime data)
    mask_ref: VMEM (tb, 1, thw)   raw first-channel MixMo mask tile (bf16)
    x_ref   : VMEM (tb, C, thw)   feature tile (native dtype)
    w*_ref  : VMEM (C, Opad)      member linear weights (native dtype)
    b*_ref  : VMEM (1, Opad)      member biases
    out_ref : VMEM (1, tb, 2*Opad) lane-dense output slab
    s_ref   : VMEM (tb, 2, C) f32 accumulators [S0 = sum x ; S1 = sum x*mask]
    """
    k = pl.program_id(1)
    nk = pl.num_programs(1)

    @pl.when(k == 0)
    def _init():
        s_ref[...] = jnp.zeros_like(s_ref)

    def accumulate(xv, maskv):
        # Build the [ones | mask] operand and let ONE batched MXU matmul
        # produce both spatial sums for this tile (keeps the VPU nearly idle).
        row = jax.lax.broadcasted_iota(jnp.int32, (1, 2, 1), 1)
        mrow = maskv.astype(xv.dtype)                       # (tb, 1, thw)
        om = jnp.where(row == 1, mrow, jnp.ones_like(mrow))  # (tb, 2, thw)
        s_ref[...] += jnp.einsum("brt,bct->brc", om, xv,
                                 preferred_element_type=jnp.float32)

    if rem == 0:
        # HW tiles evenly: steady-state path has no masking work at all.
        accumulate(x_ref[...], mask_ref[...])
    else:
        # Ragged HW tail handled in-kernel (cdiv grid; no wrapper jnp.pad of x).
        @pl.when(k < nk - 1)
        def _bulk():
            accumulate(x_ref[...], mask_ref[...])

        @pl.when(k == nk - 1)
        def _tail():
            xv = x_ref[...]
            maskv = mask_ref[...]
            lanes = jax.lax.broadcasted_iota(jnp.int32, (1, 1, xv.shape[-1]), 2)
            valid = lanes < rem
            # zero BOTH operands' overrun lanes so garbage (possibly NaN/Inf)
            # VMEM contents cannot pollute the sums of valid rows.
            accumulate(jnp.where(valid, xv, 0), jnp.where(valid, maskv, 0))

    @pl.when(k == nk - 1)
    def _finalize():
        m = m_ref[0]
        one_minus_m = 1.0 - m
        s0 = s_ref[:, 0, :]            # sum_HW(x)         (tb, C) f32
        s1 = s_ref[:, 1, :]            # sum_HW(x * mask)  (tb, C) f32
        # ones_mask  = m + (1-m)*mask  -> pooled1 = (m*S0 + (1-m)*S1) / HW
        # zeros_mask = 1 - (1-m)*mask  -> pooled2 = (S0   - (1-m)*S1) / HW
        pooled1 = (m * s0 + one_minus_m * s1) * inv_hw
        pooled2 = (s0 - one_minus_m * s1) * inv_hw
        o1 = jnp.dot(pooled1, w1_ref[...], preferred_element_type=jnp.float32)
        o2 = jnp.dot(pooled2, w2_ref[...], preferred_element_type=jnp.float32)
        # two lane-aligned static-slice stores (no in-kernel concatenate)
        out_ref[0, :, :opad] = (o1 + b1_ref[...]).astype(out_ref.dtype)
        out_ref[0, :, opad:] = (o2 + b2_ref[...]).astype(out_ref.dtype)


def _unmix_eval_kernel(x_ref, w1_ref, w2_ref, b1_ref, b2_ref,
                       out_ref, s0_ref, *, inv_hw, rem, opad):
    """Eval-specialized kernel: no mask stream, no S1 accumulation."""
    k = pl.program_id(1)
    nk = pl.num_programs(1)

    @pl.when(k == 0)
    def _init():
        s0_ref[...] = jnp.zeros_like(s0_ref)

    def accumulate(xv):
        # lane reduction goes to the XLU; f32 accumulation (cast is a no-op
        # when x is already f32).
        s0_ref[...] += jnp.sum(xv.astype(jnp.float32), axis=-1)

    if rem == 0:
        accumulate(x_ref[...])
    else:
        @pl.when(k < nk - 1)
        def _bulk():
            accumulate(x_ref[...])

        @pl.when(k == nk - 1)
        def _tail():
            xv = x_ref[...]
            lanes = jax.lax.broadcasted_iota(jnp.int32, (1, 1, xv.shape[-1]), 2)
            accumulate(jnp.where(lanes < rem, xv, 0))

    @pl.when(k == nk - 1)
    def _finalize():
        pooled = s0_ref[...] * inv_hw
        o1 = jnp.dot(pooled, w1_ref[...], preferred_element_type=jnp.float32)
        o2 = jnp.dot(pooled, w2_ref[...], preferred_element_type=jnp.float32)
        out_ref[0, :, :opad] = (o1 + b1_ref[...]).astype(out_ref.dtype)
        out_ref[0, :, opad:] = (o2 + b2_ref[...]).astype(out_ref.dtype)


def unmixing_block_forward(x, w1, b1, w2, b2, *, mixmo_mask=None, m=1.0,
                           training=False, outputs_dim=1):
    """Forward pass of UnmixingBlock.

    x          : (B, C, H, W) NCHW features (f32 or bf16).
    w1, w2     : (C, O) member linear weights (transpose of nn.Linear's (O, C)).
    b1, b2     : (O,)  member linear biases.
    mixmo_mask : (B, C_any, mH, mW) mask cached by the MixMo block (train only).
    m          : fadeout-unmixing weight (python float or jax scalar).
    """
    B, C, H, W = x.shape
    O = w1.shape[1]
    HW = H * W
    itemsize = jnp.dtype(x.dtype).itemsize

    budget, vmem_limit = _GEN_CFG[_tpu_generation()]

    # ---- flatten spatial dims (free reshape); x itself is never padded ----
    x_flat = x.reshape(B, C, HW)

    mask_flat = None
    if training:
        assert mixmo_mask is not None, "training forward requires the MixMo mask"
        mask2d = mixmo_mask[:, 0, :, :]
        mH, mW = mask2d.shape[1], mask2d.shape[2]
        if (mH, mW) != (H, W):
            # nearest-neighbour resize: src = floor(dst * in / out)
            # TODO(synk): torchvision NEAREST may differ by one pixel from this
            # formula for non-integer scale factors (nearest vs nearest-exact).
            rows = (jnp.arange(H) * mH) // H
            cols = (jnp.arange(W) * mW) // W
            mask2d = mask2d[:, rows][:, :, cols]
        # cutmix mask is binary -> exact in bf16; minimizes the mask HBM stream
        mask_flat = mask2d.reshape(B, 1, HW).astype(jnp.bfloat16)

    # HW < 128: pad that single lane tile (the whole feature map is tiny there;
    # zero padding is neutral for the sums, so no in-kernel masking needed).
    HW_eff = HW
    if HW < 128:
        x_flat = jnp.pad(x_flat, ((0, 0), (0, 0), (0, 128 - HW)))
        if training:
            mask_flat = jnp.pad(mask_flat, ((0, 0), (0, 0), (0, 128 - HW)))
        HW_eff = 128

    # ---- tiling ----
    tb, thw = _choose_tiles(B, C, HW_eff, itemsize, budget)
    nb = _cdiv(B, tb)
    nk = _cdiv(HW_eff, thw)
    rem = HW_eff - (nk - 1) * thw
    if rem == thw:
        rem = 0                                  # tiles evenly -> no tail mask

    # ---- pad only the tiny linear params to a lane-aligned output width ----
    Opad = _round_up(O, 128)
    if Opad != O:
        w1 = jnp.pad(w1, ((0, 0), (0, Opad - O)))
        w2 = jnp.pad(w2, ((0, 0), (0, Opad - O)))
        b1 = jnp.pad(b1, ((0, Opad - O),))
        b2 = jnp.pad(b2, ((0, Opad - O),))
    b1 = b1.reshape(1, Opad)
    b2 = b2.reshape(1, Opad)
    # NOTE: weights/biases stay in their native dtype (no wrapper f32 upcast);
    # the MXU accumulates in f32 via preferred_element_type.

    grid = (nb, nk)
    x_spec = pl.BlockSpec((tb, C, thw), lambda b, k: (b, 0, k))
    w_spec = pl.BlockSpec((C, Opad), lambda b, k: (0, 0))
    bias_spec = pl.BlockSpec((1, Opad), lambda b, k: (0, 0))
    # NOTE: pl.Buffered(1) on the constant-index w/bias specs would halve their
    # VMEM footprint on v7x; left at the default buffering for compatibility.
    out_spec = pl.BlockSpec((1, tb, 2 * Opad), lambda b, k: (b, 0, 0))
    out_shape = jax.ShapeDtypeStruct((nb, tb, 2 * Opad), x.dtype)

    cparams = pltpu.CompilerParams(
        dimension_semantics=("parallel", "arbitrary"),
        vmem_limit_bytes=vmem_limit)

    if training:
        kernel = functools.partial(_unmix_train_kernel,
                                   inv_hw=1.0 / HW, rem=rem, opad=Opad)
        m_arr = jnp.asarray(m, dtype=jnp.float32).reshape(1)
        out = pl.pallas_call(
            kernel,
            out_shape=out_shape,
            grid_spec=pltpu.PrefetchScalarGridSpec(
                num_scalar_prefetch=0,
                grid=grid,
                in_specs=[
                    pl.BlockSpec(memory_space=pltpu.MemorySpace.SMEM),     # m
                    pl.BlockSpec((tb, 1, thw), lambda b, k: (b, 0, k)),    # mask
                    x_spec, w_spec, w_spec, bias_spec, bias_spec,
                ],
                out_specs=out_spec,
                scratch_shapes=[pltpu.VMEM((tb, 2, C), jnp.float32)],      # [S0;S1]
            ),
            compiler_params=cparams,
        )(m_arr, mask_flat, x_flat, w1, w2, b1, b2)
    else:
        kernel = functools.partial(_unmix_eval_kernel,
                                   inv_hw=1.0 / HW, rem=rem, opad=Opad)
        out = pl.pallas_call(
            kernel,
            out_shape=out_shape,
            grid_spec=pltpu.PrefetchScalarGridSpec(
                num_scalar_prefetch=0,
                grid=grid,
                in_specs=[x_spec, w_spec, w_spec, bias_spec, bias_spec],
                out_specs=out_spec,
                scratch_shapes=[pltpu.VMEM((tb, C), jnp.float32)],         # S0
            ),
            compiler_params=cparams,
        )(x_flat, w1, w2, b1, b2)

    slab = out.reshape(nb * tb, 2 * Opad)
    o1 = slab[:B, :O]
    o2 = slab[:B, Opad:Opad + O]
    return jnp.stack([o1, o2], axis=outputs_dim)


def _reference_forward(x, w1, b1, w2, b2, *, mixmo_mask=None, m=1.0,
                       training=False, outputs_dim=1):
    """Pure-JAX reference reproducing the PyTorch module semantics."""
    if not training:
        p1 = jnp.mean(x, axis=(2, 3))
        p2 = p1
    else:
        mask = jnp.broadcast_to(mixmo_mask[:, 0:1, :, :], x.shape)
        ones_mask = mask + m * (1.0 - mask)
        inv = 1.0 - mask
        zeros_mask = inv + m * (1.0 - inv)
        p1 = jnp.mean(x * ones_mask, axis=(2, 3))
        p2 = jnp.mean(x * zeros_mask, axis=(2, 3))
    o1 = p1 @ w1 + b1
    o2 = p2 @ w2 + b2
    return jnp.stack([o1, o2], axis=outputs_dim)


if __name__ == "__main__":
    # ---- case 1: small MixMo-style shapes, 128-divisible spatial size ----
    B, C, H, W, O = 2, 4, 16, 16, 8
    key = jax.random.PRNGKey(0)
    kx, kw1, kb1, kw2, kb2 = jax.random.split(key, 5)
    x = jax.random.normal(kx, (B, C, H, W), dtype=jnp.float32)
    bound = 1.0 / (C ** 0.5)
    w1 = jax.random.uniform(kw1, (C, O), minval=-bound, maxval=bound, dtype=jnp.float32)
    b1 = jax.random.uniform(kb1, (O,), minval=-bound, maxval=bound, dtype=jnp.float32)
    w2 = jax.random.uniform(kw2, (C, O), minval=-bound, maxval=bound, dtype=jnp.float32)
    b2 = jax.random.uniform(kb2, (O,), minval=-bound, maxval=bound, dtype=jnp.float32)

    # eval path (mask == ones, both members pool the same features)
    out_eval = jax.block_until_ready(
        unmixing_block_forward(x, w1, b1, w2, b2, training=False, outputs_dim=1))
    ref_eval = _reference_forward(x, w1, b1, w2, b2, training=False, outputs_dim=1)
    assert out_eval.shape == (B, 2, O)
    assert jnp.allclose(out_eval, ref_eval, atol=2e-3, rtol=2e-3), \
        float(jnp.max(jnp.abs(out_eval - ref_eval)))

    # training path with a synthetic cutmix-style mask and m = 0.3
    yy = jnp.arange(H)[:, None]
    xx = jnp.arange(W)[None, :]
    rect = ((yy >= 4) & (yy < 12) & (xx >= 2) & (xx < 10)).astype(jnp.float32)
    mixmo_mask = jnp.broadcast_to(rect, (B, C, H, W))
    out_tr = jax.block_until_ready(
        unmixing_block_forward(x, w1, b1, w2, b2, mixmo_mask=mixmo_mask,
                               m=0.3, training=True, outputs_dim=1))
    ref_tr = _reference_forward(x, w1, b1, w2, b2, mixmo_mask=mixmo_mask,
                                m=0.3, training=True, outputs_dim=1)
    assert out_tr.shape == (B, 2, O)
    assert jnp.allclose(out_tr, ref_tr, atol=2e-3, rtol=2e-3), \
        float(jnp.max(jnp.abs(out_tr - ref_tr)))

    # outputs_dim = 0 stacking
    out_d0 = jax.block_until_ready(
        unmixing_block_forward(x, w1, b1, w2, b2, mixmo_mask=mixmo_mask,
                               m=0.3, training=True, outputs_dim=0))
    assert out_d0.shape == (2, B, O)
    assert jnp.allclose(out_d0, jnp.transpose(out_tr, (1, 0, 2)), atol=1e-6, rtol=1e-6)

    # ---- case 2: ragged shapes (B % tb != 0, HW % 128 != 0), non-python m ----
    B2, C2, H2, W2, O2 = 3, 5, 12, 12, 10          # HW = 144 -> 128 tile + tail of 16
    k2 = jax.random.split(jax.random.PRNGKey(1), 5)
    x2 = jax.random.normal(k2[0], (B2, C2, H2, W2), dtype=jnp.float32)
    bound2 = 1.0 / (C2 ** 0.5)
    w1b = jax.random.uniform(k2[1], (C2, O2), minval=-bound2, maxval=bound2, dtype=jnp.float32)
    b1b = jax.random.uniform(k2[2], (O2,), minval=-bound2, maxval=bound2, dtype=jnp.float32)
    w2b = jax.random.uniform(k2[3], (C2, O2), minval=-bound2, maxval=bound2, dtype=jnp.float32)
    b2b = jax.random.uniform(k2[4], (O2,), minval=-bound2, maxval=bound2, dtype=jnp.float32)
    rect2 = ((jnp.arange(H2)[:, None] >= 3) & (jnp.arange(H2)[:, None] < 9)
             & (jnp.arange(W2)[None, :] >= 2) & (jnp.arange(W2)[None, :] < 8)
             ).astype(jnp.float32)
    mask2 = jnp.broadcast_to(rect2, (B2, C2, H2, W2))
    out_r = jax.block_until_ready(
        unmixing_block_forward(x2, w1b, b1b, w2b, b2b, mixmo_mask=mask2,
                               m=jnp.float32(0.7), training=True, outputs_dim=1))
    ref_r = _reference_forward(x2, w1b, b1b, w2b, b2b, mixmo_mask=mask2,
                               m=0.7, training=True, outputs_dim=1)
    assert out_r.shape == (B2, 2, O2)
    assert jnp.allclose(out_r, ref_r, atol=2e-3, rtol=2e-3), \
        float(jnp.max(jnp.abs(out_r - ref_r)))

    print("KERNEL_OK")
</pallas_src>

<mosaic_0001>
module attributes {stable_mosaic.version = 11 : i64} {
  func.func @_unmix_eval_kernel(%arg0: i32, %arg1: i32, %arg2: memref<1x4x256xf32, #tpu.memory_space<vmem>>, %arg3: memref<4x128xf32, #tpu.memory_space<vmem>>, %arg4: memref<4x128xf32, #tpu.memory_space<vmem>>, %arg5: memref<1x128xf32, #tpu.memory_space<vmem>>, %arg6: memref<1x128xf32, #tpu.memory_space<vmem>>, %arg7: memref<1x1x256xf32, #tpu.memory_space<vmem>>, %arg8: memref<1x4xf32, #tpu.memory_space<vmem>>) attributes {dimension_semantics = [#tpu.dimension_semantics<parallel>, #tpu.dimension_semantics<arbitrary>], iteration_bounds = array<i64: 2, 1>, scalar_prefetch = 0 : i64, scratch_operands = 1 : i64, tpu.core_type = #tpu.core_type<tc>, window_params = [{transform_indices = @transform_0, window_bounds = array<i64: 1, 4, 256>}, {pipeline_mode = #tpu.pipeline_mode<synchronous>, transform_indices = @transform_1, window_bounds = array<i64: 4, 128>}, {pipeline_mode = #tpu.pipeline_mode<synchronous>, transform_indices = @transform_2, window_bounds = array<i64: 4, 128>}, {pipeline_mode = #tpu.pipeline_mode<synchronous>, transform_indices = @transform_3, window_bounds = array<i64: 1, 128>}, {pipeline_mode = #tpu.pipeline_mode<synchronous>, transform_indices = @transform_4, window_bounds = array<i64: 1, 128>}, {transform_indices = @transform_5, window_bounds = array<i64: 1, 1, 256>}]} {
    %c0_i32 = arith.constant 0 : i32
    %0 = arith.cmpi eq, %arg1, %c0_i32 : i32
    %1 = arith.extui %0 : i1 to i32
    %c0_i32_0 = arith.constant 0 : i32
    %2 = arith.cmpi ne, %1, %c0_i32_0 : i32
    scf.if %2 {
      %cst_9 = arith.constant 0.000000e+00 : f32
      %11 = vector.broadcast %cst_9 : f32 to vector<1x4xf32>
      %c0_10 = arith.constant 0 : index
      %c0_11 = arith.constant 0 : index
      %12 = vector.load %arg8[%c0_10, %c0_11] : memref<1x4xf32, #tpu.memory_space<vmem>>, vector<1x4xf32>
      tpu.vector_store %arg8[%c0_10, %c0_11], %11 {strides = array<i32>} : memref<1x4xf32, #tpu.memory_space<vmem>>, vector<1x4xf32>,
    } else {
    }
    %c0 = arith.constant 0 : index
    %c0_1 = arith.constant 0 : index
    %c0_2 = arith.constant 0 : index
    %3 = vector.load %arg2[%c0, %c0_1, %c0_2] : memref<1x4x256xf32, #tpu.memory_space<vmem>>, vector<1x4x256xf32>
    %c0_3 = arith.constant 0 : index
    %c0_4 = arith.constant 0 : index
    %4 = vector.load %arg8[%c0_3, %c0_4] : memref<1x4xf32, #tpu.memory_space<vmem>>, vector<1x4xf32>
    %cst = arith.constant dense<0.000000e+00> : vector<1x4xf32>
    %5 = vector.multi_reduction <add>, %3, %cst [2] : vector<1x4x256xf32> to vector<1x4xf32>
    %6 = arith.addf %4, %5 : vector<1x4xf32>
    %c0_5 = arith.constant 0 : index
    %c0_6 = arith.constant 0 : index
    %7 = vector.load %arg8[%c0_5, %c0_6] : memref<1x4xf32, #tpu.memory_space<vmem>>, vector<1x4xf32>
    tpu.vector_store %arg8[%c0_5, %c0_6], %6 {strides = array<i32>} : memref<1x4xf32, #tpu.memory_space<vmem>>, vector<1x4xf32>,
    %c0_i32_7 = arith.constant 0 : i32
    %8 = arith.cmpi eq, %arg1, %c0_i32_7 : i32
    %9 = arith.extui %8 : i1 to i32
    %c0_i32_8 = arith.constant 0 : i32
    %10 = arith.cmpi ne, %9, %c0_i32_8 : i32
    scf.if %10 {
      %c0_9 = arith.constant 0 : index
      %c0_10 = arith.constant 0 : index
      %11 = vector.load %arg8[%c0_9, %c0_10] : memref<1x4xf32, #tpu.memory_space<vmem>>, vector<1x4xf32>
      %cst_11 = arith.constant 3.906250e-03 : f32
      %12 = vector.broadcast %cst_11 : f32 to vector<1x4xf32>
      %13 = arith.mulf %11, %12 : vector<1x4xf32>
      %c0_12 = arith.constant 0 : index
      %c0_13 = arith.constant 0 : index
      %14 = vector.load %arg3[%c0_12, %c0_13] : memref<4x128xf32, #tpu.memory_space<vmem>>, vector<4x128xf32>
      %cst_14 = arith.constant dense<0.000000e+00> : vector<1x128xf32>
      %15 = tpu.matmul %13, %14, %cst_14 {dimension_numbers = #tpu.dot_dimension_numbers<[1], [0], [0], [1], [0, 0, 1, 1], [], []>} : vector<1x4xf32>, vector<4x128xf32>, vector<1x128xf32> -> vector<1x128xf32>
      %c0_15 = arith.constant 0 : index
      %c0_16 = arith.constant 0 : index
      %16 = vector.load %arg4[%c0_15, %c0_16] : memref<4x128xf32, #tpu.memory_space<vmem>>, vector<4x128xf32>
      %cst_17 = arith.constant dense<0.000000e+00> : vector<1x128xf32>
      %17 = tpu.matmul %13, %16, %cst_17 {dimension_numbers = #tpu.dot_dimension_numbers<[1], [0], [0], [1], [0, 0, 1, 1], [], []>} : vector<1x4xf32>, vector<4x128xf32>, vector<1x128xf32> -> vector<1x128xf32>
      %c0_18 = arith.constant 0 : index
      %c0_19 = arith.constant 0 : index
      %18 = vector.load %arg5[%c0_18, %c0_19] : memref<1x128xf32, #tpu.memory_space<vmem>>, vector<1x128xf32>
      %19 = arith.addf %15, %18 : vector<1x128xf32>
      %c0_20 = arith.constant 0 : index
      %c0_21 = arith.constant 0 : index
      %c0_22 = arith.constant 0 : index
      %20 = vector.load %arg7[%c0_20, %c0_21, %c0_22] : memref<1x1x256xf32, #tpu.memory_space<vmem>>, vector<1x1x128xf32>
      %21 = vector.shape_cast %20 : vector<1x1x128xf32> to vector<1x128xf32>
      %22 = vector.shape_cast %19 : vector<1x128xf32> to vector<1x1x128xf32>
      tpu.vector_store %arg7[%c0_20, %c0_21, %c0_22], %22 {strides = array<i32>} : memref<1x1x256xf32, #tpu.memory_space<vmem>>, vector<1x1x128xf32>,
      %c0_23 = arith.constant 0 : index
      %c0_24 = arith.constant 0 : index
      %23 = vector.load %arg6[%c0_23, %c0_24] : memref<1x128xf32, #tpu.memory_space<vmem>>, vector<1x128xf32>
      %24 = arith.addf %17, %23 : vector<1x128xf32>
      %c0_25 = arith.constant 0 : index
      %c0_26 = arith.constant 0 : index
      %c128 = arith.constant 128 : index
      %25 = vector.load %arg7[%c0_25, %c0_26, %c128] : memref<1x1x256xf32, #tpu.memory_space<vmem>>, vector<1x1x128xf32>
      %26 = vector.shape_cast %25 : vector<1x1x128xf32> to vector<1x128xf32>
      %27 = vector.shape_cast %24 : vector<1x128xf32> to vector<1x1x128xf32>
      tpu.vector_store %arg7[%c0_25, %c0_26, %c128], %27 {strides = array<i32>} : memref<1x1x256xf32, #tpu.memory_space<vmem>>, vector<1x1x128xf32>,
    } else {
    }
    return
  }
  func.func @transform_0(%arg0: i32, %arg1: i32) -> (i32, i32, i32) {
    %c0_i32 = arith.constant 0 : i32
    %c0_i32_0 = arith.constant 0 : i32
    return %arg0, %c0_i32, %arg1 : i32, i32, i32
  }
  func.func @transform_1(%arg0: i32, %arg1: i32) -> (i32, i32) {
    %c0_i32 = arith.constant 0 : i32
    %c0_i32_0 = arith.constant 0 : i32
    %c0_i32_1 = arith.constant 0 : i32
    return %c0_i32, %c0_i32_0 : i32, i32
  }
  func.func @transform_2(%arg0: i32, %arg1: i32) -> (i32, i32) {
    %c0_i32 = arith.constant 0 : i32
    %c0_i32_0 = arith.constant 0 : i32
    %c0_i32_1 = arith.constant 0 : i32
    return %c0_i32, %c0_i32_0 : i32, i32
  }
  func.func @transform_3(%arg0: i32, %arg1: i32) -> (i32, i32) {
    %c0_i32 = arith.constant 0 : i32
    %c0_i32_0 = arith.constant 0 : i32
    %c0_i32_1 = arith.constant 0 : i32
    return %c0_i32, %c0_i32_0 : i32, i32
  }
  func.func @transform_4(%arg0: i32, %arg1: i32) -> (i32, i32) {
    %c0_i32 = arith.constant 0 : i32
    %c0_i32_0 = arith.constant 0 : i32
    %c0_i32_1 = arith.constant 0 : i32
    return %c0_i32, %c0_i32_0 : i32, i32
  }
  func.func @transform_5(%arg0: i32, %arg1: i32) -> (i32, i32, i32) {
    %c0_i32 = arith.constant 0 : i32
    %c0_i32_0 = arith.constant 0 : i32
    %c0_i32_1 = arith.constant 0 : i32
    return %arg0, %c0_i32, %c0_i32_0 : i32, i32, i32
  }
}

</mosaic_0001>

<llo_original>
// kernel: tpu_custom_call.1
$region0: #{tpu_custom_call.1}
  #allocation0 [shape = 'u32[]', space=smem, size = 0x4, offset = 0x4, fixed_abs, tag = 'smem constant byte address 0x4 - core index']
  #allocation1 [shape = 'u32[144,128]{1,0:T(1,128)}', space=vmem, size = 0x12000, scoped, tag = 'internal scratch']
  #allocation2 [shape = 'f32[1,4]{1,0:T(1,128)}', space=vmem, size = 0x200, scoped, tag = 'scratch operand']
  %s0 = inlined_call_operand.hbm [shape: f32[2,4,256], index: 0, kind: input, shape index: {}]
  %s1 = inlined_call_operand.hbm [shape: f32[4,128], index: 1, kind: input, shape index: {}]
  %s2 = inlined_call_operand.vmem [shape: f32[4,128], index: 2, kind: input, shape index: {}]
  %s3 = inlined_call_operand.vmem [shape: f32[1,128], index: 3, kind: input, shape index: {}]
  %s4 = inlined_call_operand.vmem [shape: f32[1,128], index: 4, kind: input, shape index: {}]
  %s5 = inlined_call_operand.hbm [shape: f32[2,1,256], index: 5, kind: output, shape index: {}]
  %s6 = sld [smem:[#allocation0]]
  $region69: #{tpu_custom_call.1} parent=0
    _
  %s8 = ssub.s32 1, %s6
  %s9 = scalar_select 0, %s8, %s6
  $region1: #{tpu_custom_call.1} parent=0
    #allocation3 [shape = 'u8[8192]{0}', space=vmem, size = 0x2000, scoped, tag = 'input window, operand 0']
    #allocation4 [shape = 's32[2]{0}', space=sflag, size = 0x8, scoped, tag = 'scoped memory for tpu_custom_call.1']
    #allocation5 [shape = 's32[2]{0}', space=sflag, size = 0x8, scoped, tag = 'scoped memory for tpu_custom_call.1']
    #allocation6 [shape = 'u8[2048]{0}', space=vmem, size = 0x800, scoped, tag = 'input window, operand 1, single buffered']
    #allocation7 [shape = 's32[1]{0}', space=sflag, size = 0x4, scoped, tag = 'scoped memory for tpu_custom_call.1']
    #allocation8 [shape = 'u8[2048]{0}', space=vmem, size = 0x800, scoped, tag = 'output window, operand 0']
    %10 = vsyncpa [#allocation4], 0
    %s11 = scalar_lea.sflag [#allocation4], 1
    %12 = vsyncpa %s11, 0
    %13 = vsyncpa [#allocation7], 0
    %14 = vsyncpa [#allocation5], 0
    %s15 = scalar_lea.sflag [#allocation5], 1
    %16 = vsyncpa %s15, 0
    loop: start=0, step=1, limit=4
    $region2: #{tpu_custom_call.1} parent=1 // loop_pre_header
      _
    $region3: #{tpu_custom_call.1} parent=1 // loop_header
      %s18 = sphi 0, %s22
      %p19 = scmp.ge.s32.totalorder %s18, 4
      %s25 = sphi 0, %s37
      %s26 = sphi 0, %s33
      %s27 = sphi 0, %s25
      %s28 = sphi 0, %s26
      %s29 = sphi 0, %s27
      %s30 = sphi 0, %s28
      %s42 = sphi 0, %s44
      %s45 = sphi 0, %s42
      %s46 = sphi 0, %s45
      %s62 = sphi 0, %s46
      %s66 = sphi 0, %s66
      %s68 = sphi 0, %s66
      %s69 = sphi 0, %s68
      %s83 = sphi 0, %s69
      %s87 = sphi 0, %s87
      %s89 = sphi 0, %s87
      %s90 = sphi 0, %s89
      %s104 = sphi 0, %s90
      %s108 = sphi 0, %s108
      %s110 = sphi 0, %s108
      %s111 = sphi 0, %s110
      %s125 = sphi 0, %s111
      %s129 = sphi 0, %s129
      %s131 = sphi 0, %s129
      %s132 = sphi 0, %s131
      %s146 = sphi 0, %s132
      %s152 = sphi 0, %s154
      %s155 = sphi 0, %s152
      %s156 = sphi 0, %s155
      %s172 = sphi 0, %s156
    $region4: #{tpu_custom_call.1} parent=1 // loop_header_branch
      %21 = sbr.rel (%p19) target = $region8
    $region5: #{tpu_custom_call.1} parent=1 // loop_body
      %s23 = ssub.s32 %s18, 1
      %s24 = ssub.s32 %s18, 2
      %s31 = sadd.s32 1, %s26
      %p32 = scmp.ge.s32.totalorder %s31, 1
      %s33 = scalar_select %p32, 0, %s31
      %s34 = sadd.s32 1, %s25
      %s35 = scalar_select %p32, %s34, %s25
      %p36 = scmp.ge.s32.totalorder %s35, 2
      %s37 = scalar_select %p36, 0, %s35
      %s38 = ssub.s32 %s25, %s37
      %s39 = ssub.s32 %s26, %s33
      %s40 = sor.u32 %s38, %s39
      %p41 = scmp.eq.s32.totalorder %s40, 0
      %s43 = sadd.s32 %s42, 1
      %s44 = scalar_select %p41, %s42, %s43
      %p47 = pneg %p41
      %p48 = scmp.eq.s32.totalorder %s18, 1
      %p49 = por %p47, %p48
      %p50 = scmp.ne.s32.totalorder %s42, %s45
      %p51 = scmp.eq.s32.totalorder %s18, 0
      %p52 = por %p50, %p51
      %p53 = scmp.ne.s32.totalorder %s42, %s45
      %p54 = scmp.eq.s32.totalorder %s23, 1
      %p55 = por %p53, %p54
      %p56 = scmp.ne.s32.totalorder %s45, %s46
      %p57 = scmp.eq.s32.totalorder %s23, 0
      %p58 = por %p56, %p57
      %p59 = scmp.ne.s32.totalorder %s45, %s46
      %p60 = scmp.eq.s32.totalorder %s24, 1
      %p61 = por %p59, %p60
      %p63 = scmp.ne.s32.totalorder %s46, %s62
      %p64 = scmp.eq.s32.totalorder %s24, 0
      %p65 = por %p63, %p64
      %s67 = sadd.s32 %s66, 1
      %p70 = scmp.eq.s32.totalorder %s18, 1
      %p71 = scmp.ne.s32.totalorder %s66, %s68
      %p72 = scmp.eq.s32.totalorder %s18, 0
      %p73 = por %p71, %p72
      %p74 = scmp.ne.s32.totalorder %s66, %s68
      %p75 = scmp.eq.s32.totalorder %s23, 1
      %p76 = por %p74, %p75
      %p77 = scmp.ne.s32.totalorder %s68, %s69
      %p78 = scmp.eq.s32.totalorder %s23, 0
      %p79 = por %p77, %p78
      %p80 = scmp.ne.s32.totalorder %s68, %s69
      %p81 = scmp.eq.s32.totalorder %s24, 1
      %p82 = por %p80, %p81
      %p84 = scmp.ne.s32.totalorder %s69, %s83
      %p85 = scmp.eq.s32.totalorder %s24, 0
      %p86 = por %p84, %p85
      %s88 = sadd.s32 %s87, 1
      %p91 = scmp.eq.s32.totalorder %s18, 1
      %p92 = scmp.ne.s32.totalorder %s87, %s89
      %p93 = scmp.eq.s32.totalorder %s18, 0
      %p94 = por %p92, %p93
      %p95 = scmp.ne.s32.totalorder %s87, %s89
      %p96 = scmp.eq.s32.totalorder %s23, 1
      %p97 = por %p95, %p96
      %p98 = scmp.ne.s32.totalorder %s89, %s90
      %p99 = scmp.eq.s32.totalorder %s23, 0
      %p100 = por %p98, %p99
      %p101 = scmp.ne.s32.totalorder %s89, %s90
      %p102 = scmp.eq.s32.totalorder %s24, 1
      %p103 = por %p101, %p102
      %p105 = scmp.ne.s32.totalorder %s90, %s104
      %p106 = scmp.eq.s32.totalorder %s24, 0
      %p107 = por %p105, %p106
      %s109 = sadd.s32 %s108, 1
      %p112 = scmp.eq.s32.totalorder %s18, 1
      %p113 = scmp.ne.s32.totalorder %s108, %s110
      %p114 = scmp.eq.s32.totalorder %s18, 0
      %p115 = por %p113, %p114
      %p116 = scmp.ne.s32.totalorder %s108, %s110
      %p117 = scmp.eq.s32.totalorder %s23, 1
      %p118 = por %p116, %p117
      %p119 = scmp.ne.s32.totalorder %s110, %s111
      %p120 = scmp.eq.s32.totalorder %s23, 0
      %p121 = por %p119, %p120
      %p122 = scmp.ne.s32.totalorder %s110, %s111
      %p123 = scmp.eq.s32.totalorder %s24, 1
      %p124 = por %p122, %p123
      %p126 = scmp.ne.s32.totalorder %s111, %s125
      %p127 = scmp.eq.s32.totalorder %s24, 0
      %p128 = por %p126, %p127
      %s130 = sadd.s32 %s129, 1
      %p133 = scmp.eq.s32.totalorder %s18, 1
      %p134 = scmp.ne.s32.totalorder %s129, %s131
      %p135 = scmp.eq.s32.totalorder %s18, 0
      %p136 = por %p134, %p135
      %p137 = scmp.ne.s32.totalorder %s129, %s131
      %p138 = scmp.eq.s32.totalorder %s23, 1
      %p139 = por %p137, %p138
      %p140 = scmp.ne.s32.totalorder %s131, %s132
      %p141 = scmp.eq.s32.totalorder %s23, 0
      %p142 = por %p140, %p141
      %p143 = scmp.ne.s32.totalorder %s131, %s132
      %p144 = scmp.eq.s32.totalorder %s24, 1
      %p145 = por %p143, %p144
      %p147 = scmp.ne.s32.totalorder %s132, %s146
      %p148 = scmp.eq.s32.totalorder %s24, 0
      %p149 = por %p147, %p148
      %s150 = ssub.s32 %s25, %s37
      %p151 = scmp.eq.s32.totalorder %s150, 0
      %s153 = sadd.s32 %s152, 1
      %s154 = scalar_select %p151, %s152, %s153
      %p157 = pneg %p151
      %p158 = scmp.eq.s32.totalorder %s18, 1
      %p159 = por %p157, %p158
      %p160 = scmp.ne.s32.totalorder %s152, %s155
      %p161 = scmp.eq.s32.totalorder %s18, 0
      %p162 = por %p160, %p161
      %p163 = scmp.ne.s32.totalorder %s152, %s155
      %p164 = scmp.eq.s32.totalorder %s23, 1
      %p165 = por %p163, %p164
      %p166 = scmp.ne.s32.totalorder %s155, %s156
      %p167 = scmp.eq.s32.totalorder %s23, 0
      %p168 = por %p166, %p167
      %p169 = scmp.ne.s32.totalorder %s155, %s156
      %p170 = scmp.eq.s32.totalorder %s24, 1
      %p171 = por %p169, %p170
      %p173 = scmp.ne.s32.totalorder %s156, %s172
      %p174 = scmp.eq.s32.totalorder %s24, 0
      %p175 = por %p173, %p174
      %p176 = scmp.le.s32.totalorder 1, %s18
      %p177 = scmp.lt.s32.totalorder %s18, 3
      %p178 = pnand %p176, %p177
      %p179 = pneg %p178
      // Predicated region
      $region9: #{tpu_custom_call.1} parent=5 // pred_check
        _
      $region10: #{tpu_custom_call.1} parent=5 // pred_check_branch
        %181 = sbr.rel (%p178) target = $region12
      $region11: #{tpu_custom_call.1} parent=5 // pred_region
        %s182 = ssub.s32 %s18, 1
        // Predicated region
        $region13: #{tpu_custom_call.1} parent=11 // pred_check
          %p183 = pneg %p79
        $region14: #{tpu_custom_call.1} parent=11 // pred_check_branch
          %185 = sbr.rel (%p183) target = $region16
        $region15: #{tpu_custom_call.1} parent=11 // pred_region
          %s187 = ssub.s32 64, 64
          %188 = vsyncadd [#allocation7], %s187
          %s190 = sshll.u32 [#allocation6], 4
          %s191 = int_to_ptr.vmem [resolvable:$true] %s190
          %193 = dma.hbm_to_vmem [thread:$0]  %s1, 64, %s191, [#allocation7]
        $region16: #{tpu_custom_call.1} parent=11 // pred_fallthru
          _
        // Predicated region
        $region17: #{tpu_custom_call.1} parent=11 // pred_check
          %p194 = pneg %p100
        $region18: #{tpu_custom_call.1} parent=11 // pred_check_branch
          %196 = sbr.rel (%p194) target = $region20
        $region19: #{tpu_custom_call.1} parent=11 // pred_region
          _
        $region20: #{tpu_custom_call.1} parent=11 // pred_fallthru
          _
        // Predicated region
        $region21: #{tpu_custom_call.1} parent=11 // pred_check
          %p197 = pneg %p121
        $region22: #{tpu_custom_call.1} parent=11 // pred_check_branch
          %199 = sbr.rel (%p197) target = $region24
        $region23: #{tpu_custom_call.1} parent=11 // pred_region
          _
        $region24: #{tpu_custom_call.1} parent=11 // pred_fallthru
          _
        // Predicated region
        $region25: #{tpu_custom_call.1} parent=11 // pred_check
          %p200 = pneg %p142
        $region26: #{tpu_custom_call.1} parent=11 // pred_check_branch
          %202 = sbr.rel (%p200) target = $region28
        $region27: #{tpu_custom_call.1} parent=11 // pred_region
          _
        $region28: #{tpu_custom_call.1} parent=11 // pred_fallthru
          _
      $region12: #{tpu_custom_call.1} parent=5 // pred_fallthru
        _
      %p203 = scmp.lt.s32.totalorder %s18, 2
      // Predicated region
      $region29: #{tpu_custom_call.1} parent=5 // pred_check
        %p204 = pneg %p203
      $region30: #{tpu_custom_call.1} parent=5 // pred_check_branch
        %206 = sbr.rel (%p204) target = $region32
      $region31: #{tpu_custom_call.1} parent=5 // pred_region
        // Predicated region
        $region33: #{tpu_custom_call.1} parent=31 // pred_check
          %p207 = pneg %p52
        $region34: #{tpu_custom_call.1} parent=31 // pred_check_branch
          %209 = sbr.rel (%p207) target = $region36
        $region35: #{tpu_custom_call.1} parent=31 // pred_region
          %s210 = sand.u32 %s42, 1
          %s211 = scalar_lea.sflag [#allocation4], %s210
          %s212 = sand.u32 %s42, 1
          %s213 = smul.addr %s212, 8
          %s214 = scalar_lea.vmem [#allocation3], %s213
          %s215 = smul.u32 2, %s26
          %s217 = ssub.s32 128, 128
          %218 = vsyncadd %s211, %s217
          %s219 = smul.addr %s25, 2
          %s220 = sadd.s32 %s215, %s219
          %s221 = smul.addr %s220, 64
          %s222 = scalar_lea.hbm %s0, %s221
          %s224 = sshll.u32 %s214, 4
          %s225 = int_to_ptr.vmem [resolvable:$true] %s224
          %227 = dma.hbm_to_vmem [thread:$0]  %s222, 128, %s225, %s211
        $region36: #{tpu_custom_call.1} parent=31 // pred_fallthru
          _
      $region32: #{tpu_custom_call.1} parent=5 // pred_fallthru
        _
      %p228 = scmp.le.s32.totalorder 1, %s18
      %p229 = scmp.lt.s32.totalorder %s18, 3
      %p230 = pnand %p228, %p229
      %p231 = pneg %p230
      // Predicated region
      $region37: #{tpu_custom_call.1} parent=5 // pred_check
        _
      $region38: #{tpu_custom_call.1} parent=5 // pred_check_branch
        %233 = sbr.rel (%p230) target = $region40
      $region39: #{tpu_custom_call.1} parent=5 // pred_region
        %s234 = ssub.s32 %s18, 1
        %s235 = sand.u32 %s45, 1
        %s236 = scalar_lea.sflag [#allocation4], %s235
        %s237 = sand.u32 %s45, 1
        %s238 = smul.addr %s237, 8
        %s239 = scalar_lea.vmem [#allocation3], %s238
        // Predicated region
        $region41: #{tpu_custom_call.1} parent=39 // pred_check
          %p240 = pneg %p58
        $region42: #{tpu_custom_call.1} parent=39 // pred_check_branch
          %242 = sbr.rel (%p240) target = $region44
        $region43: #{tpu_custom_call.1} parent=39 // pred_region
          %243 = dma.done %s236, 128
        $region44: #{tpu_custom_call.1} parent=39 // pred_fallthru
          _
        // Predicated region
        $region45: #{tpu_custom_call.1} parent=39 // pred_check
          %p244 = pneg %p79
        $region46: #{tpu_custom_call.1} parent=39 // pred_check_branch
          %246 = sbr.rel (%p244) target = $region48
        $region47: #{tpu_custom_call.1} parent=39 // pred_region
          %247 = dma.done [#allocation7], 64
        $region48: #{tpu_custom_call.1} parent=39 // pred_fallthru
          _
        %s248 = sand.u32 %s45, 1
        %s249 = scalar_lea.sflag [#allocation4], %s248
        %s250 = sand.u32 %s45, 1
        %s251 = smul.addr %s250, 8
        %s252 = scalar_lea.vmem [#allocation3], %s251
        %p253 = pneg %p58
        %p254 = pneg %p55
        %p255 = pneg %p79
        %p256 = pneg %p76
        %p257 = pneg %p100
        %p258 = pneg %p97
        %p259 = pneg %p121
        %p260 = pneg %p118
        %p261 = pneg %p142
        %p262 = pneg %p139
        %p263 = pneg %p168
        %p264 = pneg %p165
        %s265 = sand.u32 %s155, 1
        %s266 = scalar_lea.sflag [#allocation5], %s265
        %s267 = sand.u32 %s155, 1
        %s268 = smul.addr %s267, 2
        %s269 = scalar_lea.vmem [#allocation8], %s268
        %s270 = smul.u32 2, %s28
        %p271 = scmp.eq.s32.totalorder %s28, 0
        // Predicated region
        $region49: #{tpu_custom_call.1} parent=39 // pred_check
          %p272 = pneg %p271
        $region50: #{tpu_custom_call.1} parent=39 // pred_check_branch
          %274 = sbr.rel (%p272) target = $region52
        $region51: #{tpu_custom_call.1} parent=39 // pred_region
          %vm275 = vcmask 24576
          %276 = vst.msk [vmem:[#allocation2] sm:$0x1] %vm275, 0.0
        $region52: #{tpu_custom_call.1} parent=39 // pred_fallthru
          _
        %v277 = vld [vmem:[%s239] sm:$0xff]
        %v278 = vld [vmem:[#allocation2] sm:$0x1]
        %v280 = vcombine.high %v277, %v277
        %vm282 = vcmask 1043456
        %v283 = vsel %vm282, %v277, 0.0
        %v284 = vsel %vm282, %v280, 0.0
        %v285 = vadd.f32 %v283, %v284
        %286 = vadd.xlane.f32.xlu0 %v285
        %v287 = vpop.xlane.xlu0 %286
        %v289 = vlaneseq
        %v290 = vshrl.u32 %v289, 7
        %v291 = vsub.s32 0, %v290
        %v292 = vrot.slane %v287, %v291
        %v293 = vlaneseq
        %v294 = vshrl.u32 %v293, 7
        %v295 = vsub.s32 1, %v294
        %v296 = vrot.slane %v287, %v295
        %v297 = vlaneseq
        %v298 = vshrl.u32 %v297, 7
        %v299 = vsub.s32 2, %v298
        %v300 = vrot.slane %v287, %v299
        %v301 = vlaneseq
        %v302 = vshrl.u32 %v301, 7
        %v303 = vsub.s32 3, %v302
        %v304 = vrot.slane %v287, %v303
        %v305 = vcombine.low %v292, %v296
        %v306 = vcombine.low %v300, %v304
        %v308 = vunpack.c.l.s4 1966171168
        %v309 = vunpack.c.0.s8 %v308
        %v310 = vlaneseq
        %v311 = vshrl.u32 %v310, 7
        %v312 = vsub.s32 %v309, %v311
        %v313 = vrot.slane %v305, %v312
        %v315 = vunpack.c.l.s4 1966171168
        %v316 = vunpack.c.0.s8 %v315
        %v317 = vlaneseq
        %v318 = vshrl.u32 %v317, 7
        %v319 = vsub.s32 %v316, %v318
        %v320 = vrot.slane %v306, %v319
        %v321 = vcombine.low %v313, %v320
        %v323 = vunpack.c.l.s4 1966171168
        %v324 = vunpack.c.0.s8 %v323
        %v325 = vlaneseq
        %v326 = vshrl.u32 %v325, 7
        %v327 = vsub.s32 %v324, %v326
        %v328 = vrot.slane %v321, %v327
        %329 = vset.pattern.permute.xlu0 0
        %330 = vperm.xlu0 %329, %v328
        %v331 = vpop.permute.xlu0 %330
        %v332 = vlaneseq
        %v333 = vand.u32 %v332, 127
        %v334 = vlaneseq
        %v335 = vshrl.u32 %v334, 7
        %v336 = vsub.s32 %v333, %v335
        %v337 = vrot.slane %v331, %v336
        %v339 = vunpack.c.l.s4 1966171168
        %v340 = vunpack.c.0.s8 %v339
        %v341 = vlaneseq
        %v342 = vshrl.u32 %v341, 7
        %v343 = vsub.s32 %v340, %v342
        %v344 = vrot.slane %v337, %v343
        %v346 = vunpack.c.l.s4 1966171168
        %v347 = vunpack.c.0.s8 %v346
        %v348 = vlaneseq
        %v349 = vshrl.u32 %v348, 7
        %v350 = vsub.s32 %v347, %v349
        %v351 = vrot.slane %v344, %v350
        %v353 = vadd.f32 %v278, %v351
        %vm354 = vcmask 24576
        %355 = vst.msk [vmem:[#allocation2] sm:$0x1] %vm354, %v353
        // Predicated region
        $region53: #{tpu_custom_call.1} parent=39 // pred_check
          %p356 = pneg %p271
        $region54: #{tpu_custom_call.1} parent=39 // pred_check_branch
          %358 = sbr.rel (%p356) target = $region56
        $region55: #{tpu_custom_call.1} parent=39 // pred_region
          %v359 = vld [vmem:[#allocation2] sm:$0x1]
          %v360 = vmul.f32 %v359, 0.00390625
          %v361 = vld [vmem:[#allocation6] sm:$0xf]
          %v362 = vld [vmem:[%s2] sm:$0xf]
          %v363 = vld [vmem:[%s3] sm:$0x1]
          %vm364 = vcmask 31744
          %v366 = vsel %vm364, %v360, 0
          %v369 = vsel %vm282, %v361, 0
          %371 = vmatprep.subr.mxu0 0.0
          %372 = vmatpush1.msra.mxu0 %v369
          %373 = vmatprep.subr.mxu0 0.0
          %374 = vmatpush1.msra.mxu0 0.0
          %375 = vmatprep.subr.mxu0 0.0
          %376 = vmatpush1.msra.mxu0 0.0
          %377 = vmatprep.subr.mxu0 0.0
          %378 = vmatpush1.msra.mxu0 0.0
          %379 = vmatprep.subr.mxu0 0.0
          %380 = vmatpush1.msra.mxu0 0.0
          %381 = vmatprep.subr.mxu0 0.0
          %382 = vmatpush1.msra.mxu0 0.0
          %383 = vmatprep.subr.mxu0 0.0
          %384 = vmatpush1.msra.mxu0 0.0
          %385 = vmatprep.subr.mxu0 0.0
          %386 = vmatpush1.msra.mxu0 0.0
          %387 = vmatprep.subr.mxu0 0.0
          %388 = vmatpush1.msra.mxu0 0.0
          %389 = vmatprep.subr.mxu0 0.0
          %390 = vmatpush1.msra.mxu0 0.0
          %391 = vmatprep.subr.mxu0 0.0
          %392 = vmatpush1.msra.mxu0 0.0
          %393 = vmatprep.subr.mxu0 0.0
          %394 = vmatpush1.msra.mxu0 0.0
          %395 = vmatprep.subr.mxu0 0.0
          %396 = vmatpush1.msra.mxu0 0.0
          %397 = vmatprep.subr.mxu0 0.0
          %398 = vmatpush1.msra.mxu0 0.0
          %399 = vmatprep.subr.mxu0 0.0
          %400 = vmatpush1.msra.mxu0 0.0
          %401 = vmatprep.subr.mxu0 0.0
          %402 = vmatpush1.msra.mxu0 0.0
          %403 = vmatprep.subr.mxu0 0.0
          %404 = vmatpush1.msra.mxu0 0.0
          %405 = vmatprep.subr.mxu0 0.0
          %406 = vmatpush1.msra.mxu0 0.0
          %407 = vmatprep.subr.mxu0 0.0
          %408 = vmatpush1.msra.mxu0 0.0
          %409 = vmatprep.subr.mxu0 0.0
          %410 = vmatpush1.msra.mxu0 0.0
          %411 = vmatprep.subr.mxu0 0.0
          %412 = vmatpush1.msra.mxu0 0.0
          %413 = vmatprep.subr.mxu0 0.0
          %414 = vmatpush1.msra.mxu0 0.0
          %415 = vmatprep.subr.mxu0 0.0
          %416 = vmatpush1.msra.mxu0 0.0
          %417 = vmatprep.subr.mxu0 0.0
          %418 = vmatpush1.msra.mxu0 0.0
          %419 = vmatprep.subr.mxu0 0.0
          %420 = vmatpush1.msra.mxu0 0.0
          %421 = vmatprep.subr.mxu0 0.0
          %422 = vmatpush1.msra.mxu0 0.0
          %423 = vmatprep.subr.mxu0 0.0
          %424 = vmatpush1.msra.mxu0 0.0
          %425 = vmatprep.subr.mxu0 0.0
          %426 = vmatpush1.msra.mxu0 0.0
          %427 = vmatprep.subr.mxu0 0.0
          %428 = vmatpush1.msra.mxu0 0.0
          %429 = vmatprep.subr.mxu0 0.0
          %430 = vmatpush1.msra.mxu0 0.0
          %431 = vmatprep.subr.mxu0 0.0
          %432 = vmatpush1.msra.mxu0 0.0
          %433 = vmatprep.subr.mxu0 0.0
          %434 = vmatpush1.msra.mxu0 0.0
          %435 = vmatprep.mubr.f32.mxu0 0.0
          %436 = vmatmul.mubr.f32.gmra.mrb[0].mxu0 %v366
          %v437 = vpop.f32.mrb[0].mxu0
          %v438 = vadd.f32 %v363, %v437
          %v439 = vpop.f32.mrb[0].mxu0
          %440 = vdwg.mxu0
          %v441 = vlaneseq
          %vm442 = vcmp.ge.s32.totalorder %v441, 0
          %vm443 = vcmp.lt.s32.totalorder %v441, 128
          %vm444 = vmand %vm442, %vm443
          %445 = vst.msk [vmem:[%s269] sm:$0x1] %vm444, %v438
          %v446 = vld [vmem:[%s4] sm:$0x1]
          %v448 = vsel %vm282, %v362, 0
          %450 = vmatprep.subr.mxu0 0.0
          %451 = vmatpush1.msra.mxu0 %v448
          %452 = vmatprep.subr.mxu0 0.0
          %453 = vmatpush1.msra.mxu0 0.0
          %454 = vmatprep.subr.mxu0 0.0
          %455 = vmatpush1.msra.mxu0 0.0
          %456 = vmatprep.subr.mxu0 0.0
          %457 = vmatpush1.msra.mxu0 0.0
          %458 = vmatprep.subr.mxu0 0.0
          %459 = vmatpush1.msra.mxu0 0.0
          %460 = vmatprep.subr.mxu0 0.0
          %461 = vmatpush1.msra.mxu0 0.0
          %462 = vmatprep.subr.mxu0 0.0
          %463 = vmatpush1.msra.mxu0 0.0
          %464 = vmatprep.subr.mxu0 0.0
          %465 = vmatpush1.msra.mxu0 0.0
          %466 = vmatprep.subr.mxu0 0.0
          %467 = vmatpush1.msra.mxu0 0.0
          %468 = vmatprep.subr.mxu0 0.0
          %469 = vmatpush1.msra.mxu0 0.0
          %470 = vmatprep.subr.mxu0 0.0
          %471 = vmatpush1.msra.mxu0 0.0
          %472 = vmatprep.subr.mxu0 0.0
          %473 = vmatpush1.msra.mxu0 0.0
          %474 = vmatprep.subr.mxu0 0.0
          %475 = vmatpush1.msra.mxu0 0.0
          %476 = vmatprep.subr.mxu0 0.0
          %477 = vmatpush1.msra.mxu0 0.0
          %478 = vmatprep.subr.mxu0 0.0
          %479 = vmatpush1.msra.mxu0 0.0
          %480 = vmatprep.subr.mxu0 0.0
          %481 = vmatpush1.msra.mxu0 0.0
          %482 = vmatprep.subr.mxu0 0.0
          %483 = vmatpush1.msra.mxu0 0.0
          %484 = vmatprep.subr.mxu0 0.0
          %485 = vmatpush1.msra.mxu0 0.0
          %486 = vmatprep.subr.mxu0 0.0
          %487 = vmatpush1.msra.mxu0 0.0
          %488 = vmatprep.subr.mxu0 0.0
          %489 = vmatpush1.msra.mxu0 0.0
          %490 = vmatprep.subr.mxu0 0.0
          %491 = vmatpush1.msra.mxu0 0.0
          %492 = vmatprep.subr.mxu0 0.0
          %493 = vmatpush1.msra.mxu0 0.0
          %494 = vmatprep.subr.mxu0 0.0
          %495 = vmatpush1.msra.mxu0 0.0
          %496 = vmatprep.subr.mxu0 0.0
          %497 = vmatpush1.msra.mxu0 0.0
          %498 = vmatprep.subr.mxu0 0.0
          %499 = vmatpush1.msra.mxu0 0.0
          %500 = vmatprep.subr.mxu0 0.0
          %501 = vmatpush1.msra.mxu0 0.0
          %502 = vmatprep.subr.mxu0 0.0
          %503 = vmatpush1.msra.mxu0 0.0
          %504 = vmatprep.subr.mxu0 0.0
          %505 = vmatpush1.msra.mxu0 0.0
          %506 = vmatprep.subr.mxu0 0.0
          %507 = vmatpush1.msra.mxu0 0.0
          %508 = vmatprep.subr.mxu0 0.0
          %509 = vmatpush1.msra.mxu0 0.0
          %510 = vmatprep.subr.mxu0 0.0
          %511 = vmatpush1.msra.mxu0 0.0
          %512 = vmatprep.subr.mxu0 0.0
          %513 = vmatpush1.msra.mxu0 0.0
          %514 = vmatprep.mubr.f32.mxu0 0.0
          %515 = vmatmul.mubr.f32.gmra.mrb[0].mxu0 %v366
          %v516 = vpop.f32.mrb[0].mxu0
          %v517 = vadd.f32 %v446, %v516
          %v518 = vpop.f32.mrb[0].mxu0
          %519 = vdwg.mxu0
          %520 = vst.msk [vmem:[%s269 + $0x1] sm:$0x1] %vm444, %v517
        $region56: #{tpu_custom_call.1} parent=39 // pred_fallthru
          _
        %s521 = sand.u32 %s155, 1
        %s522 = scalar_lea.sflag [#allocation5], %s521
        %s523 = sand.u32 %s155, 1
        %s524 = smul.addr %s523, 2
        %s525 = scalar_lea.vmem [#allocation8], %s524
        // Predicated region
        $region57: #{tpu_custom_call.1} parent=39 // pred_check
          %p526 = pneg %p165
        $region58: #{tpu_custom_call.1} parent=39 // pred_check_branch
          %528 = sbr.rel (%p526) target = $region60
        $region59: #{tpu_custom_call.1} parent=39 // pred_region
          %s530 = ssub.s32 32, 32
          %531 = vsyncadd %s522, %s530
          %s532 = smul.addr %s27, 2
          %s533 = smul.addr %s532, 16
          %s534 = scalar_lea.hbm %s5, %s533
          %s536 = sshll.u32 %s525, 4
          %s537 = int_to_ptr.vmem [resolvable:$true] %s536
          %539 = dma.vmem_to_hbm [thread:$0]  %s537, 32, %s534, %s522
        $region60: #{tpu_custom_call.1} parent=39 // pred_fallthru
          _
      $region40: #{tpu_custom_call.1} parent=5 // pred_fallthru
        _
      %p540 = scmp.le.s32.totalorder 2, %s18
      // Predicated region
      $region61: #{tpu_custom_call.1} parent=5 // pred_check
        %p541 = pneg %p540
      $region62: #{tpu_custom_call.1} parent=5 // pred_check_branch
        %543 = sbr.rel (%p541) target = $region64
      $region63: #{tpu_custom_call.1} parent=5 // pred_region
        %s544 = ssub.s32 %s18, 2
        // Predicated region
        $region65: #{tpu_custom_call.1} parent=63 // pred_check
          %p545 = pneg %p171
        $region66: #{tpu_custom_call.1} parent=63 // pred_check_branch
          %547 = sbr.rel (%p545) target = $region68
        $region67: #{tpu_custom_call.1} parent=63 // pred_region
          %s548 = sand.u32 %s156, 1
          %s549 = scalar_lea.sflag [#allocation5], %s548
          %s550 = sand.u32 %s156, 1
          %s551 = smul.addr %s550, 2
          %s552 = scalar_lea.vmem [#allocation8], %s551
          %553 = dma.done %s549, 32
        $region68: #{tpu_custom_call.1} parent=63 // pred_fallthru
          _
      $region64: #{tpu_custom_call.1} parent=5 // pred_fallthru
        _
    $region6: #{tpu_custom_call.1} parent=1 // loop_footer
      %s22 = sadd.s32 1, %s18
    $region7: #{tpu_custom_call.1} parent=1 // loop_footer_branch
      %17 = sbr.rel target = $region3
    $region8: #{tpu_custom_call.1} parent=1 // loop_exit
      _
    %554 = vsyncpa [#allocation4], 1
    %s555 = scalar_lea.sflag [#allocation4], 1
    %556 = vsyncpa %s555, 1
    %557 = vsyncpa [#allocation7], 1
    %558 = vsyncpa [#allocation5], 1
    %s559 = scalar_lea.sflag [#allocation5], 1
    %560 = vsyncpa %s559, 1

</llo_original>
